<compile_context>
chip_gen: v7x
topology: tpu7x:2x2x1
jax: 0.10.0
libtpu: 0.0.40
codegen_flags: <defaults>
</compile_context>

<pallas_src>
import functools

import jax
import jax.numpy as jnp
from jax import lax
from jax.experimental import pallas as pl
from jax.experimental.pallas import tpu as pltpu

LANE = 128
BATCH_TILE = 256  # MXU M fill for v6e/v7x (2x256^2), multiple of 128 for v5e (4x128^2)


def task_head_kernel(x_ref, wconv_ref, shift_ref, wdense_ref, bdense_ref, out_ref,
                     *, is_classification):
    """Whole head = two lane-dense MXU matmuls + f32 VPU epilogue.

    x_ref      : (tb, C*K*L)    im2col'd input tile (compute dtype)
    wconv_ref  : (C*K*L, F*L)   block-diagonal conv matrix (conv bias + BN scale folded in)
    shift_ref  : (1, F*L)       folded BN shift, f-major (nn.Flatten order), f32
    wdense_ref : (F*L, O_pad)   dense weight (transposed, zero-padded to 128 lanes)
    bdense_ref : (1, O_pad)     dense bias (pad lanes: -1e30 for softmax, 0 for regression)
    out_ref    : (tb, O_pad)    f32
    """
    # Conv1d + bias + BatchNorm1d(eval) scale -> one matmul (all folded into wconv).
    acc = jnp.dot(x_ref[...], wconv_ref[...], preferred_element_type=jnp.float32)
    # BN shift + ReLU (dropout_conv is identity in eval mode).
    y = jnp.maximum(acc + shift_ref[...], 0.0)                      # (tb, F*L), f32
    # Flatten + Linear (flatten order baked into the wconv/wdense layouts).
    logits = jnp.dot(y.astype(wdense_ref.dtype), wdense_ref[...],
                     preferred_element_type=jnp.float32) + bdense_ref[...]
    if is_classification:
        m = jnp.max(logits, axis=-1, keepdims=True)
        e = jnp.exp(logits - m)
        # Exact normalization (rows sum to 1) — approx reciprocal not worth it here.
        out_ref[...] = (e / jnp.sum(e, axis=-1, keepdims=True)).astype(out_ref.dtype)
    else:
        out_ref[...] = logits.astype(out_ref.dtype)


def fold_task_head_params(wc, bc, gamma, beta, rmean, rvar, wd, bd, *,
                          eps=1e-5, compute_dtype=jnp.bfloat16):
    """One-time (parameter-load time) construction of the folded weight slabs."""
    F, C, K = wc.shape
    out_dim, d_in = wd.shape
    assert d_in % F == 0, "dense input size must be num_filters * conv_out_len"
    L = d_in // F
    o_pad = max(LANE, pl.cdiv(out_dim, LANE) * LANE)

    inv_std = 1.0 / jnp.sqrt(rvar + eps)
    scale = gamma * inv_std                                # (F,)
    shift = beta - rmean * scale + bc * scale              # (F,)  conv bias folded in
    # Block-diagonal conv matrix: Wconv[(c,k,l), (f,m)] = wc[f,c,k] * scale[f] * delta(l,m).
    # Output column index f*L + m already matches nn.Flatten((B,F,L)) order -> no in-kernel
    # reshape needed.
    eye_l = jnp.eye(L, dtype=jnp.float32)
    wconv = jnp.einsum('fck,lm->cklfm', wc * scale[:, None, None], eye_l)
    wconv = wconv.reshape(C * K * L, F * L)
    shift_flat = jnp.repeat(shift, L).reshape(1, F * L)    # f-major (Flatten order)

    wdense = jnp.pad(wd.T, ((0, 0), (0, o_pad - out_dim)))              # (F*L, o_pad)
    bdense_cls = jnp.pad(bd.reshape(1, -1), ((0, 0), (0, o_pad - out_dim)),
                         constant_values=-1e30)            # pad lanes softmax-neutral
    bdense_reg = jnp.pad(bd.reshape(1, -1), ((0, 0), (0, o_pad - out_dim)))  # pad = 0

    return {
        'wconv': wconv.astype(compute_dtype),
        'shift': shift_flat.astype(jnp.float32),
        'wdense': wdense.astype(compute_dtype),
        'bdense_cls': bdense_cls.astype(jnp.float32),
        'bdense_reg': bdense_reg.astype(jnp.float32),
    }


def task_head_forward(x, params, *, out_dim, is_classification,
                      kernel_size=3, conv_padding=1):
    """x: (B, C, L) float. Returns (B, out_dim) float32. Wrap in jax.jit."""
    B, C, L = x.shape
    K = kernel_size
    wconv, shift, wdense = params['wconv'], params['shift'], params['wdense']
    bdense = params['bdense_cls'] if is_classification else params['bdense_reg']
    CKL, FL = wconv.shape
    o_pad = wdense.shape[1]
    assert CKL == C * K * L, "folded params do not match input shape"
    compute_dtype = wconv.dtype
    itemsize = wconv.dtype.itemsize

    # im2col: xflat[b, (c,k,l)] = xpad[b, c, l+k].  Stays inside the same jit as the
    # pallas_call so XLA fuses the pad/stack/reshape instead of launching separate ops.
    xp = jnp.pad(x, ((0, 0), (0, 0), (conv_padding, conv_padding)))
    xcol = jnp.stack([xp[:, :, k:k + L] for k in range(K)], axis=2)   # (B, C, K, L)
    xflat = xcol.reshape(B, CKL).astype(compute_dtype)

    kernel = functools.partial(task_head_kernel, is_classification=is_classification)

    if B >= BATCH_TILE:
        # Batch grid: 256-row tiles, weights resident, parallel across v7x's 2 TCs.
        tb = BATCH_TILE
        n_blk = pl.cdiv(B, tb)
        b_pad = n_blk * tb
        if b_pad != B:
            xflat = jnp.pad(xflat, ((0, b_pad - B), (0, 0)))
        cost = pl.CostEstimate(
            flops=2 * b_pad * CKL * FL + 2 * b_pad * FL * o_pad,
            transcendentals=b_pad * o_pad if is_classification else 0,
            bytes_accessed=(b_pad * CKL * itemsize + CKL * FL * itemsize
                            + FL * o_pad * itemsize + (FL + o_pad) * 4
                            + b_pad * o_pad * 4))
        out = pl.pallas_call(
            kernel,
            out_shape=jax.ShapeDtypeStruct((b_pad, o_pad), jnp.float32),
            grid=(n_blk,),
            in_specs=[pl.BlockSpec((tb, CKL), lambda i: (i, 0)),
                      pl.BlockSpec((CKL, FL), lambda i: (0, 0)),
                      pl.BlockSpec((1, FL), lambda i: (0, 0)),
                      pl.BlockSpec((FL, o_pad), lambda i: (0, 0)),
                      pl.BlockSpec((1, o_pad), lambda i: (0, 0))],
            out_specs=pl.BlockSpec((tb, o_pad), lambda i: (i, 0)),
            compiler_params=pltpu.CompilerParams(dimension_semantics=("parallel",)),
            cost_estimate=cost,
        )(xflat, wconv, shift, wdense, bdense)
        return out[:B, :out_dim]

    # Grid-free single invocation: every operand fits in a handful of vregs.
    cost = pl.CostEstimate(
        flops=2 * B * CKL * FL + 2 * B * FL * o_pad,
        transcendentals=B * o_pad if is_classification else 0,
        bytes_accessed=(B * CKL * itemsize + CKL * FL * itemsize
                        + FL * o_pad * itemsize + (FL + o_pad) * 4
                        + B * o_pad * 4))
    out = pl.pallas_call(
        kernel,
        out_shape=jax.ShapeDtypeStruct((B, o_pad), jnp.float32),
        in_specs=[pl.BlockSpec(memory_space=pltpu.MemorySpace.VMEM)] * 5,
        out_specs=pl.BlockSpec(memory_space=pltpu.MemorySpace.VMEM),
        cost_estimate=cost,
    )(xflat, wconv, shift, wdense, bdense)
    return out[:, :out_dim]


def task_head_reference(x, wc, bc, gamma, beta, rmean, rvar, wd, bd,
                        *, is_classification=True, eps=1e-5):
    """Pure-JAX reference matching the PyTorch module in eval mode."""
    conv = lax.conv_general_dilated(
        x, wc, window_strides=(1,), padding=((1, 1),),
        dimension_numbers=("NCH", "OIH", "NCH")) + bc[None, :, None]
    y = (conv - rmean[None, :, None]) / jnp.sqrt(rvar[None, :, None] + eps)
    y = y * gamma[None, :, None] + beta[None, :, None]
    y = jnp.maximum(y, 0.0)
    h = y.reshape(x.shape[0], -1)
    logits = h @ wd.T + bd[None, :]
    if is_classification:
        logits = jax.nn.softmax(logits, axis=1)
    return logits


if __name__ == "__main__":
    # Shapes consistent with TaskHead(input_channels=4, backbone_output_length=16,
    #                                 num_filters=8, output_dim=5)
    B, C, L = 2, 4, 16
    F, K = 8, 3
    OUT = 5
    D_IN = F * L  # conv_output_length == L (k=3, pad=1, stride=1)

    key = jax.random.PRNGKey(0)
    ks = jax.random.split(key, 9)
    x = jax.random.normal(ks[0], (B, C, L), jnp.float32)
    wc = jax.random.normal(ks[1], (F, C, K), jnp.float32) * 0.2
    bc = jax.random.normal(ks[2], (F,), jnp.float32) * 0.1
    gamma = 1.0 + 0.1 * jax.random.normal(ks[3], (F,), jnp.float32)
    beta = 0.1 * jax.random.normal(ks[4], (F,), jnp.float32)
    rmean = 0.1 * jax.random.normal(ks[5], (F,), jnp.float32)
    rvar = jax.random.uniform(ks[6], (F,), jnp.float32, 0.5, 1.5)
    wd = jax.random.normal(ks[7], (OUT, D_IN), jnp.float32) * 0.1
    bd = jax.random.normal(ks[8], (OUT,), jnp.float32) * 0.1

    # TODO(synk): dropout layers are identity (inference); BatchNorm uses running stats
    # (eval mode) — training-mode batch statistics are not reproduced here.

    # One-time parameter folding (parameter-load time, NOT per forward).
    params_bf16 = fold_task_head_params(wc, bc, gamma, beta, rmean, rvar, wd, bd)  # bf16 MXU
    params_f32 = fold_task_head_params(wc, bc, gamma, beta, rmean, rvar, wd, bd,
                                       compute_dtype=jnp.float32)

    fwd_cls = jax.jit(functools.partial(task_head_forward,
                                        out_dim=OUT, is_classification=True))
    fwd_reg = jax.jit(functools.partial(task_head_forward,
                                        out_dim=OUT, is_classification=False))

    ref_c = task_head_reference(x, wc, bc, gamma, beta, rmean, rvar, wd, bd,
                                is_classification=True)
    ref_r = task_head_reference(x, wc, bc, gamma, beta, rmean, rvar, wd, bd,
                                is_classification=False)

    # --- bf16 MXU inputs (default path), loose tolerance ---
    out_c = jax.block_until_ready(fwd_cls(x, params_bf16))
    assert out_c.shape == (B, OUT)
    assert jnp.allclose(out_c, ref_c, rtol=5e-2, atol=4e-2), (
        f"bf16 classification mismatch: max abs err {jnp.max(jnp.abs(out_c - ref_c))}")

    out_r = jax.block_until_ready(fwd_reg(x, params_bf16))
    assert out_r.shape == (B, OUT)
    assert jnp.allclose(out_r, ref_r, rtol=5e-2, atol=5e-2), (
        f"bf16 regression mismatch: max abs err {jnp.max(jnp.abs(out_r - ref_r))}")

    # --- f32 MXU inputs, tighter structural check ---
    out_c32 = jax.block_until_ready(fwd_cls(x, params_f32))
    assert jnp.allclose(out_c32, ref_c, rtol=1e-2, atol=1e-2), (
        f"f32 classification mismatch: max abs err {jnp.max(jnp.abs(out_c32 - ref_c))}")

    out_r32 = jax.block_until_ready(fwd_reg(x, params_f32))
    assert jnp.allclose(out_r32, ref_r, rtol=1e-2, atol=1e-2), (
        f"f32 regression mismatch: max abs err {jnp.max(jnp.abs(out_r32 - ref_r))}")

    # --- batched path: grid over B (256-row tiles, "parallel" -> v7x 2-TC sharding) ---
    Bb = 300  # exercises multi-block grid + row padding
    xb = jax.random.normal(jax.random.PRNGKey(1), (Bb, C, L), jnp.float32)
    out_b = jax.block_until_ready(fwd_cls(xb, params_bf16))
    ref_b = task_head_reference(xb, wc, bc, gamma, beta, rmean, rvar, wd, bd,
                                is_classification=True)
    assert out_b.shape == (Bb, OUT)
    assert jnp.allclose(out_b, ref_b, rtol=5e-2, atol=5e-2), (
        f"batched classification mismatch: max abs err {jnp.max(jnp.abs(out_b - ref_b))}")

    print("KERNEL_OK")
</pallas_src>

<mosaic_0001>
module attributes {stable_mosaic.version = 11 : i64} {
  func.func @task_head_kernel(%arg0: memref<2x192xbf16, #tpu.memory_space<vmem>>, %arg1: memref<192x128xbf16, #tpu.memory_space<vmem>>, %arg2: memref<1x128xf32, #tpu.memory_space<vmem>>, %arg3: memref<128x128xbf16, #tpu.memory_space<vmem>>, %arg4: memref<1x128xf32, #tpu.memory_space<vmem>>, %arg5: memref<2x128xf32, #tpu.memory_space<vmem>>) attributes {dimension_semantics = [], scalar_prefetch = 0 : i64, scratch_operands = 0 : i64, tpu.core_type = #tpu.core_type<tc>} {
    %c0 = arith.constant 0 : index
    %c0_0 = arith.constant 0 : index
    %0 = vector.load %arg0[%c0, %c0_0] : memref<2x192xbf16, #tpu.memory_space<vmem>>, vector<2x192xbf16>
    %c0_1 = arith.constant 0 : index
    %c0_2 = arith.constant 0 : index
    %1 = vector.load %arg1[%c0_1, %c0_2] : memref<192x128xbf16, #tpu.memory_space<vmem>>, vector<192x128xbf16>
    %cst = arith.constant dense<0.000000e+00> : vector<2x128xf32>
    %2 = tpu.matmul %0, %1, %cst {dimension_numbers = #tpu.dot_dimension_numbers<[1], [0], [0], [1], [0, 0, 1, 1], [], []>} : vector<2x192xbf16>, vector<192x128xbf16>, vector<2x128xf32> -> vector<2x128xf32>
    %c0_3 = arith.constant 0 : index
    %c0_4 = arith.constant 0 : index
    %3 = vector.load %arg2[%c0_3, %c0_4] : memref<1x128xf32, #tpu.memory_space<vmem>>, vector<1x128xf32>
    %4 = vector.broadcast %3 : vector<1x128xf32> to vector<2x128xf32>
    %5 = arith.addf %2, %4 : vector<2x128xf32>
    %cst_5 = arith.constant 0.000000e+00 : f32
    %6 = vector.broadcast %cst_5 : f32 to vector<2x128xf32>
    %7 = arith.maximumf %5, %6 : vector<2x128xf32>
    %8 = arith.truncf %7 : vector<2x128xf32> to vector<2x128xbf16>
    %c0_6 = arith.constant 0 : index
    %c0_7 = arith.constant 0 : index
    %9 = vector.load %arg3[%c0_6, %c0_7] : memref<128x128xbf16, #tpu.memory_space<vmem>>, vector<128x128xbf16>
    %cst_8 = arith.constant dense<0.000000e+00> : vector<2x128xf32>
    %10 = tpu.matmul %8, %9, %cst_8 {dimension_numbers = #tpu.dot_dimension_numbers<[1], [0], [0], [1], [0, 0, 1, 1], [], []>} : vector<2x128xbf16>, vector<128x128xbf16>, vector<2x128xf32> -> vector<2x128xf32>
    %c0_9 = arith.constant 0 : index
    %c0_10 = arith.constant 0 : index
    %11 = vector.load %arg4[%c0_9, %c0_10] : memref<1x128xf32, #tpu.memory_space<vmem>>, vector<1x128xf32>
    %12 = vector.broadcast %11 : vector<1x128xf32> to vector<2x128xf32>
    %13 = arith.addf %10, %12 : vector<2x128xf32>
    %cst_11 = arith.constant dense<0xFF800000> : vector<2xf32>
    %14 = vector.multi_reduction <maximumf>, %13, %cst_11 [1] : vector<2x128xf32> to vector<2xf32>
    %15 = vector.shape_cast %14 : vector<2xf32> to vector<2x1xf32>
    %16 = vector.broadcast %15 : vector<2x1xf32> to vector<2x128xf32>
    %17 = arith.subf %13, %16 : vector<2x128xf32>
    %18 = math.exp %17 : vector<2x128xf32>
    %cst_12 = arith.constant dense<0.000000e+00> : vector<2xf32>
    %19 = vector.multi_reduction <add>, %18, %cst_12 [1] : vector<2x128xf32> to vector<2xf32>
    %20 = vector.shape_cast %19 : vector<2xf32> to vector<2x1xf32>
    %21 = vector.broadcast %20 : vector<2x1xf32> to vector<2x128xf32>
    %22 = arith.divf %18, %21 : vector<2x128xf32>
    %c0_13 = arith.constant 0 : index
    %c0_14 = arith.constant 0 : index
    %23 = vector.load %arg5[%c0_13, %c0_14] : memref<2x128xf32, #tpu.memory_space<vmem>>, vector<2x128xf32>
    tpu.vector_store %arg5[%c0_13, %c0_14], %22 {strides = array<i32>} : memref<2x128xf32, #tpu.memory_space<vmem>>, vector<2x128xf32>,
    return
  }
}

</mosaic_0001>

<llo_original>
// kernel: task_head_forward.1
$region0: #{task_head_forward.1}
  #allocation0 [shape = 'u32[]', space=smem, size = 0x4, offset = 0x4, fixed_abs, tag = 'smem constant byte address 0x4 - core index']
  #allocation1 [shape = 'u32[144,128]{1,0:T(1,128)}', space=vmem, size = 0x12000, scoped, tag = 'internal scratch']
  %s0 = inlined_call_operand.vmem [shape: bf16[2,192], index: 0, kind: input, shape index: {}]
  %s1 = inlined_call_operand.vmem [shape: bf16[192,128], index: 1, kind: input, shape index: {}]
  %s2 = inlined_call_operand.vmem [shape: f32[1,128], index: 2, kind: input, shape index: {}]
  %s3 = inlined_call_operand.hbm [shape: bf16[128,128], index: 3, kind: input, shape index: {}]
  %s4 = inlined_call_operand.vmem [shape: f32[1,128], index: 4, kind: input, shape index: {}]
  %s5 = inlined_call_operand.hbm [shape: f32[2,128], index: 5, kind: output, shape index: {}]
  %s6 = sld [smem:[#allocation0]]
  $region34: #{task_head_forward.1} parent=0
    _
  %s8 = ssub.s32 1, %s6
  %s9 = scalar_select 0, %s8, %s6
  $region1: #{task_head_forward.1} parent=0
    #allocation2 [shape = 'u8[32768]{0}', space=vmem, size = 0x8000, scoped, tag = 'input window, operand 3, single buffered']
    #allocation3 [shape = 's32[1]{0}', space=sflag, size = 0x4, scoped, tag = 'scoped memory for task_head_forward.1']
    #allocation4 [shape = 's32[1]{0}', space=sflag, size = 0x4, scoped, tag = 'scoped memory for task_head_forward.1']
    #allocation5 [shape = 'u8[1024]{0}', space=vmem, size = 0x400, scoped, tag = 'output window, operand 0, single buffered']
    %10 = vsyncpa [#allocation3], 0
    %11 = vsyncpa [#allocation4], 0
    // Predicated region
    $region2: #{task_head_forward.1} parent=1 // pred_check
      _
    $region3: #{task_head_forward.1} parent=1 // pred_check_branch
      %13 = sbr.rel (0) target = $region5
    $region4: #{task_head_forward.1} parent=1 // pred_region
      _
    $region5: #{task_head_forward.1} parent=1 // pred_fallthru
      _
    // Predicated region
    $region6: #{task_head_forward.1} parent=1 // pred_check
      _
    $region7: #{task_head_forward.1} parent=1 // pred_check_branch
      %15 = sbr.rel (0) target = $region9
    $region8: #{task_head_forward.1} parent=1 // pred_region
      _
    $region9: #{task_head_forward.1} parent=1 // pred_fallthru
      _
    // Predicated region
    $region10: #{task_head_forward.1} parent=1 // pred_check
      _
    $region11: #{task_head_forward.1} parent=1 // pred_check_branch
      %17 = sbr.rel (0) target = $region13
    $region12: #{task_head_forward.1} parent=1 // pred_region
      _
    $region13: #{task_head_forward.1} parent=1 // pred_fallthru
      _
    // Predicated region
    $region14: #{task_head_forward.1} parent=1 // pred_check
      _
    $region15: #{task_head_forward.1} parent=1 // pred_check_branch
      %19 = sbr.rel (0) target = $region17
    $region16: #{task_head_forward.1} parent=1 // pred_region
      %s21 = ssub.s32 1024, 1024
      %22 = vsyncadd [#allocation3], %s21
      %s23 = sshll.u32 [#allocation2], 4
      %s24 = int_to_ptr.vmem [resolvable:$true] %s23
      %29 = dma.hbm_to_vmem [thread:$0]  %s3, 1024, %s24, [#allocation3], 64, 64, 4
    $region17: #{task_head_forward.1} parent=1 // pred_fallthru
      _
    // Predicated region
    $region18: #{task_head_forward.1} parent=1 // pred_check
      _
    $region19: #{task_head_forward.1} parent=1 // pred_check_branch
      %31 = sbr.rel (0) target = $region21
    $region20: #{task_head_forward.1} parent=1 // pred_region
      _
    $region21: #{task_head_forward.1} parent=1 // pred_fallthru
      _
    // Predicated region
    $region22: #{task_head_forward.1} parent=1 // pred_check
      _
    $region23: #{task_head_forward.1} parent=1 // pred_check_branch
      %33 = sbr.rel (0) target = $region25
    $region24: #{task_head_forward.1} parent=1 // pred_region
      %34 = dma.done [#allocation3], 1024
    $region25: #{task_head_forward.1} parent=1 // pred_fallthru
      _
    %v36 = vld [vmem:[%s0] sm:$0x3]
    %v37 = vld [vmem:[%s1] sm:$0xf]
    %v38 = vld [vmem:[%s1 + $0x4] sm:$0xf]
    %v39 = vld [vmem:[%s1 + $0x8] sm:$0xf]
    %v40 = vld [vmem:[%s1 + $0xc] sm:$0xf]
    %v41 = vld [vmem:[%s1 + $0x10] sm:$0xf]
    %v42 = vld [vmem:[%s1 + $0x14] sm:$0xf]
    %v43 = vld [vmem:[%s1 + $0x18] sm:$0xf]
    %v44 = vld [vmem:[%s1 + $0x1c] sm:$0xf]
    %v45 = vld [vmem:[%s1 + $0x20] sm:$0xf]
    %v46 = vld [vmem:[%s1 + $0x24] sm:$0xf]
    %v47 = vld [vmem:[%s1 + $0x28] sm:$0xf]
    %v48 = vld [vmem:[%s1 + $0x2c] sm:$0xf]
    %v49 = vld [vmem:[%s1 + $0x30] sm:$0xf]
    %v50 = vld [vmem:[%s1 + $0x34] sm:$0xf]
    %v51 = vld [vmem:[%s1 + $0x38] sm:$0xf]
    %v52 = vld [vmem:[%s1 + $0x3c] sm:$0xf]
    %v53 = vld [vmem:[%s1 + $0x40] sm:$0xf]
    %v54 = vld [vmem:[%s1 + $0x44] sm:$0xf]
    %v55 = vld [vmem:[%s1 + $0x48] sm:$0xf]
    %v56 = vld [vmem:[%s1 + $0x4c] sm:$0xf]
    %v57 = vld [vmem:[%s1 + $0x50] sm:$0xf]
    %v58 = vld [vmem:[%s1 + $0x54] sm:$0xf]
    %v59 = vld [vmem:[%s1 + $0x58] sm:$0xf]
    %v60 = vld [vmem:[%s1 + $0x5c] sm:$0xf]
    %v61 = vld [vmem:[%s2] sm:$0x1]
    %v63 = vlaneseq
    %v64 = vshrl.u32 %v63, 7
    %v65 = vsub.s32 0, %v64
    %v66 = vrot.slane %v61, %v65
    %v70 = vunpack.c.l.s4 1966171168
    %v71 = vunpack.c.0.s8 %v70
    %v72 = vlaneseq
    %v73 = vshrl.u32 %v72, 7
    %v74 = vsub.s32 %v71, %v73
    %v75 = vrot.slane %v36, %v74
    %v76 = vcombine.high %v75, %v75
    %v78 = vunpack.c.l.s4 1966171168
    %v79 = vunpack.c.0.s8 %v78
    %v80 = vlaneseq
    %v81 = vshrl.u32 %v80, 7
    %v82 = vsub.s32 %v79, %v81
    %v83 = vrot.slane %v75, %v82
    %v85 = vunpack.c.l.s4 1966171168
    %v86 = vunpack.c.0.s8 %v85
    %v87 = vlaneseq
    %v88 = vshrl.u32 %v87, 7
    %v89 = vsub.s32 %v86, %v88
    %v90 = vrot.slane %v76, %v89
    %v116 = vunpack.c.l.b16 %v37
    %v117 = vunpack.c.l.b16 %v38
    %v118 = vunpack.c.l.b16 %v39
    %v119 = vunpack.c.l.b16 %v40
    %v120 = vunpack.c.l.b16 %v41
    %v121 = vunpack.c.l.b16 %v42
    %v122 = vunpack.c.l.b16 %v43
    %v123 = vunpack.c.l.b16 %v44
    %v124 = vunpack.c.l.b16 %v45
    %v125 = vunpack.c.l.b16 %v46
    %v126 = vunpack.c.l.b16 %v47
    %v127 = vunpack.c.l.b16 %v48
    %v128 = vunpack.c.l.b16 %v49
    %v129 = vunpack.c.l.b16 %v50
    %v130 = vunpack.c.l.b16 %v51
    %v131 = vunpack.c.l.b16 %v52
    %v132 = vunpack.c.l.b16 %v53
    %v133 = vunpack.c.l.b16 %v54
    %v134 = vunpack.c.l.b16 %v55
    %v135 = vunpack.c.l.b16 %v56
    %v136 = vunpack.c.l.b16 %v57
    %v137 = vunpack.c.l.b16 %v58
    %v138 = vunpack.c.l.b16 %v59
    %v139 = vunpack.c.l.b16 %v60
    %v140 = vpack.c.b16 %v117, %v116
    %v141 = vpack.c.b16 %v119, %v118
    %v142 = vpack.c.b16 %v121, %v120
    %v143 = vpack.c.b16 %v123, %v122
    %v144 = vpack.c.b16 %v125, %v124
    %v145 = vpack.c.b16 %v127, %v126
    %v146 = vpack.c.b16 %v129, %v128
    %v147 = vpack.c.b16 %v131, %v130
    %v148 = vpack.c.b16 %v133, %v132
    %v149 = vpack.c.b16 %v135, %v134
    %v150 = vpack.c.b16 %v137, %v136
    %v151 = vpack.c.b16 %v139, %v138
    %vm164 = vcmask 523264
    %v166 = vsel %vm164, %v90, 0
    %168 = vmatprep.subr.bf16.mxu0 0
    %169 = vmatpush1.bf16.msra.mxu0 %v140
    %170 = vmatprep.subr.bf16.mxu0 0
    %171 = vmatpush1.bf16.msra.mxu0 %v141
    %172 = vmatprep.subr.bf16.mxu0 0
    %173 = vmatpush1.bf16.msra.mxu0 %v142
    %174 = vmatprep.subr.bf16.mxu0 0
    %175 = vmatpush1.bf16.msra.mxu0 %v143
    %176 = vmatprep.subr.bf16.mxu0 0
    %177 = vmatpush1.bf16.msra.mxu0 %v144
    %178 = vmatprep.subr.bf16.mxu0 0
    %179 = vmatpush1.bf16.msra.mxu0 %v145
    %180 = vmatprep.subr.bf16.mxu0 0
    %181 = vmatpush1.bf16.msra.mxu0 %v146
    %182 = vmatprep.subr.bf16.mxu0 0
    %183 = vmatpush1.bf16.msra.mxu0 %v147
    %184 = vmatprep.subr.bf16.mxu0 0
    %185 = vmatpush1.bf16.msra.mxu0 %v148
    %186 = vmatprep.subr.bf16.mxu0 0
    %187 = vmatpush1.bf16.msra.mxu0 %v149
    %188 = vmatprep.subr.bf16.mxu0 0
    %189 = vmatpush1.bf16.msra.mxu0 %v150
    %190 = vmatprep.subr.bf16.mxu0 0
    %191 = vmatpush1.bf16.msra.mxu0 %v151
    %192 = vmatprep.subr.bf16.mxu0 0
    %193 = vmatpush1.bf16.msra.mxu0 0
    %194 = vmatprep.subr.bf16.mxu0 0
    %195 = vmatpush1.bf16.msra.mxu0 0
    %196 = vmatprep.subr.bf16.mxu0 0
    %197 = vmatpush1.bf16.msra.mxu0 0
    %198 = vmatprep.subr.bf16.mxu0 0
    %199 = vmatpush1.bf16.msra.mxu0 0
    %200 = vmatprep.mubr.bf16.mxu0 %v166
    %201 = vmatmul.mubr.bf16.gmra.mrb[0].mxu0 %v83
    %v202 = vpop.f32.mrb[0].mxu0
    %v203 = vadd.f32 %v66, %v202
    %v204 = vpop.f32.mrb[0].mxu0
    %v205 = vpop.f32.mrb[0].mxu0
    %v206 = vpop.f32.mrb[0].mxu0
    %207 = vdwg.mxu0
    %v208 = vmax.f32 %v203, 0.0
    %v209 = vpack.c.bf16 %v208, %v208
    %v210 = vld [vmem:[#allocation2] sm:$0xf]
    %v211 = vld [vmem:[#allocation2 + $0x4] sm:$0xf]
    %v212 = vld [vmem:[#allocation2 + $0x8] sm:$0xf]
    %v213 = vld [vmem:[#allocation2 + $0xc] sm:$0xf]
    %v214 = vld [vmem:[#allocation2 + $0x10] sm:$0xf]
    %v215 = vld [vmem:[#allocation2 + $0x14] sm:$0xf]
    %v216 = vld [vmem:[#allocation2 + $0x18] sm:$0xf]
    %v217 = vld [vmem:[#allocation2 + $0x1c] sm:$0xf]
    %v218 = vld [vmem:[#allocation2 + $0x20] sm:$0xf]
    %v219 = vld [vmem:[#allocation2 + $0x24] sm:$0xf]
    %v220 = vld [vmem:[#allocation2 + $0x28] sm:$0xf]
    %v221 = vld [vmem:[#allocation2 + $0x2c] sm:$0xf]
    %v222 = vld [vmem:[#allocation2 + $0x30] sm:$0xf]
    %v223 = vld [vmem:[#allocation2 + $0x34] sm:$0xf]
    %v224 = vld [vmem:[#allocation2 + $0x38] sm:$0xf]
    %v225 = vld [vmem:[#allocation2 + $0x3c] sm:$0xf]
    %v226 = vld [vmem:[%s4] sm:$0x1]
    %v228 = vlaneseq
    %v229 = vshrl.u32 %v228, 7
    %v230 = vsub.s32 0, %v229
    %v231 = vrot.slane %v226, %v230
    %v249 = vunpack.c.l.b16 %v210
    %v250 = vunpack.c.l.b16 %v211
    %v251 = vunpack.c.l.b16 %v212
    %v252 = vunpack.c.l.b16 %v213
    %v253 = vunpack.c.l.b16 %v214
    %v254 = vunpack.c.l.b16 %v215
    %v255 = vunpack.c.l.b16 %v216
    %v256 = vunpack.c.l.b16 %v217
    %v257 = vunpack.c.l.b16 %v218
    %v258 = vunpack.c.l.b16 %v219
    %v259 = vunpack.c.l.b16 %v220
    %v260 = vunpack.c.l.b16 %v221
    %v261 = vunpack.c.l.b16 %v222
    %v262 = vunpack.c.l.b16 %v223
    %v263 = vunpack.c.l.b16 %v224
    %v264 = vunpack.c.l.b16 %v225
    %v265 = vpack.c.b16 %v250, %v249
    %v266 = vpack.c.b16 %v252, %v251
    %v267 = vpack.c.b16 %v254, %v253
    %v268 = vpack.c.b16 %v256, %v255
    %v269 = vpack.c.b16 %v258, %v257
    %v270 = vpack.c.b16 %v260, %v259
    %v271 = vpack.c.b16 %v262, %v261
    %v272 = vpack.c.b16 %v264, %v263
    %281 = vmatprep.subr.bf16.mxu0 0
    %282 = vmatpush1.bf16.msra.mxu0 %v265
    %283 = vmatprep.subr.bf16.mxu0 0
    %284 = vmatpush1.bf16.msra.mxu0 %v266
    %285 = vmatprep.subr.bf16.mxu0 0
    %286 = vmatpush1.bf16.msra.mxu0 %v267
    %287 = vmatprep.subr.bf16.mxu0 0
    %288 = vmatpush1.bf16.msra.mxu0 %v268
    %289 = vmatprep.subr.bf16.mxu0 0
    %290 = vmatpush1.bf16.msra.mxu0 %v269
    %291 = vmatprep.subr.bf16.mxu0 0
    %292 = vmatpush1.bf16.msra.mxu0 %v270
    %293 = vmatprep.subr.bf16.mxu0 0
    %294 = vmatpush1.bf16.msra.mxu0 %v271
    %295 = vmatprep.subr.bf16.mxu0 0
    %296 = vmatpush1.bf16.msra.mxu0 %v272
    %297 = vmatprep.subr.bf16.mxu0 0
    %298 = vmatpush1.bf16.msra.mxu0 0
    %299 = vmatprep.subr.bf16.mxu0 0
    %300 = vmatpush1.bf16.msra.mxu0 0
    %301 = vmatprep.subr.bf16.mxu0 0
    %302 = vmatpush1.bf16.msra.mxu0 0
    %303 = vmatprep.subr.bf16.mxu0 0
    %304 = vmatpush1.bf16.msra.mxu0 0
    %305 = vmatprep.subr.bf16.mxu0 0
    %306 = vmatpush1.bf16.msra.mxu0 0
    %307 = vmatprep.subr.bf16.mxu0 0
    %308 = vmatpush1.bf16.msra.mxu0 0
    %309 = vmatprep.subr.bf16.mxu0 0
    %310 = vmatpush1.bf16.msra.mxu0 0
    %311 = vmatprep.subr.bf16.mxu0 0
    %312 = vmatpush1.bf16.msra.mxu0 0
    %313 = vmatprep.mubr.bf16.mxu0 0
    %314 = vmatmul.mubr.bf16.gmra.mrb[0].mxu0 %v209
    %v315 = vpop.f32.mrb[0].mxu0
    %v316 = vadd.f32 %v231, %v315
    %v317 = vpop.f32.mrb[0].mxu0
    %v318 = vpop.f32.mrb[0].mxu0
    %v319 = vpop.f32.mrb[0].mxu0
    %320 = vdwg.mxu0
    %vm321 = vcmask 1041408
    %v322 = vsel %vm321, %v316, -inf
    %323 = vmax.xlane.f32.xlu0 %v322
    %v324 = vpop.xlane.xlu0 %323
    %v325 = vsub.f32 %v316, %v324
    %v326 = vmul.f32 %v325, 1.442695
    %v327 = vpow.pop %v326
    %v328 = vsel %vm321, %v327, 0.0
    %329 = vadd.xlane.f32.xlu0 %v328
    %v330 = vpop.xlane.xlu0 %329
    %v331 = vrcp.pop %v330
    %v332 = vmul.f32 %v327, %v331
    %333 = vst [vmem:[#allocation5] sm:$0x3] %v332
    // Predicated region
    $region26: #{task_head_forward.1} parent=1 // pred_check
      _
    $region27: #{task_head_forward.1} parent=1 // pred_check_branch
      %335 = sbr.rel (0) target = $region29
    $region28: #{task_head_forward.1} parent=1 // pred_region
      %s337 = ssub.s32 32, 32
      %338 = vsyncadd [#allocation4], %s337
      %s340 = sshll.u32 [#allocation5], 4
      %s341 = int_to_ptr.vmem [resolvable:$true] %s340
      %343 = dma.vmem_to_hbm [thread:$0]  %s341, 32, %s5, [#allocation4]
    $region29: #{task_head_forward.1} parent=1 // pred_fallthru
      _
    // Predicated region
    $region30: #{task_head_forward.1} parent=1 // pred_check
      _
    $region31: #{task_head_forward.1} parent=1 // pred_check_branch
      %345 = sbr.rel (0) target = $region33
    $region32: #{task_head_forward.1} parent=1 // pred_region
      %346 = dma.done [#allocation4], 32
    $region33: #{task_head_forward.1} parent=1 // pred_fallthru
      _
    %347 = vsyncpa [#allocation3], 1
    %348 = vsyncpa [#allocation4], 1

</llo_original>
